<compile_context>
chip_gen: v7x
topology: tpu7x:2x2x1
jax: 0.10.0
libtpu: 0.0.40
codegen_flags: <defaults>
</compile_context>

<pallas_src>
from functools import partial

import jax
import jax.numpy as jnp
from jax.experimental import pallas as pl
from jax.experimental.pallas import tpu as pltpu

NEG_SLOPE = 0.01  # PyTorch nn.LeakyReLU default
IN_FEATURES = 11


def _leaky_relu(x):
    return jnp.where(x > 0, x, NEG_SLOPE * x)


def _round_up(n, m):
    return ((n + m - 1) // m) * m


def mlp_kernel(xT_ref, w1_ref, b1_ref, w2_ref, b2_ref, w3_ref, b3_ref, o_ref,
               *, compute_dtype):
    """Feature-major MLP tile.

    xT_ref: (11, TB)   w1: (64, 11) b1: (64, 1)
                       w2: (32, 64) b2: (32, 1)
                       w3: (1, 32)  b3: (1, 1)
    o_ref : (1, TB)    (batch on lanes -> lane-dense stores)
    """
    cd = compute_dtype
    xT = xT_ref[...].astype(cd)                                      # (11, TB)

    h1 = jnp.dot(w1_ref[...].astype(cd), xT,
                 preferred_element_type=jnp.float32) + b1_ref[...]   # (64, TB)
    h1 = _leaky_relu(h1)

    h2 = jnp.dot(w2_ref[...].astype(cd), h1.astype(cd),
                 preferred_element_type=jnp.float32) + b2_ref[...]   # (32, TB)
    h2 = _leaky_relu(h2)

    z = jnp.dot(w3_ref[...].astype(cd), h2.astype(cd),
                preferred_element_type=jnp.float32) + b3_ref[...]    # (1, TB)

    # sigmoid(z) = 1 / (1 + exp(-z)); exp and approx reciprocal both run on
    # the EUP slot (free alongside MXU/VPU work).
    o_ref[...] = pl.reciprocal(1.0 + jnp.exp(-z), approx=True).astype(o_ref.dtype)


def pred_model_forward(x, params, *, block_b=4096, matmul_dtype=jnp.float32):
    """x: (B, 11) f32; params in PyTorch layout: W (out,in), b (out,1)."""
    w1, b1, w2, b2, w3, b3 = params
    B, F = x.shape
    assert F == IN_FEATURES

    # Batch tile: multiple of 128 (lane width).  Feature-major tiles are tiny
    # (<2.5 MiB at TB=4096 incl. activations), so double buffering fits well
    # inside the scoped-VMEM budget on v5e/v6e (128 MiB) and v7x (64 MiB).
    b_lane = _round_up(max(B, 1), 128)
    TB = min(block_b, b_lane)
    Bp = _round_up(b_lane, TB)
    grid = (Bp // TB,)

    # Feature-major, zero-padded input (padding columns are sliced off below).
    xT = jnp.pad(x.T.astype(jnp.float32), ((0, 0), (0, Bp - B)))

    resident = lambda a: pl.BlockSpec(a.shape, lambda i: (0, 0))

    out_T = pl.pallas_call(
        partial(mlp_kernel, compute_dtype=matmul_dtype),
        out_shape=jax.ShapeDtypeStruct((1, Bp), jnp.float32),
        grid=grid,
        in_specs=[
            pl.BlockSpec((F, TB), lambda i: (0, i)),   # x tile (pipelined)
            resident(w1), resident(b1),                # weights stay in VMEM
            resident(w2), resident(b2),
            resident(w3), resident(b3),
        ],
        out_specs=pl.BlockSpec((1, TB), lambda i: (0, i)),
        compiler_params=pltpu.CompilerParams(
            dimension_semantics=("parallel",),          # megacore split on v7x
            vmem_limit_bytes=32 * 1024 * 1024,
        ),
    )(xT, w1, b1, w2, b2, w3, b3)

    return out_T[:, :B].T                              # (B, 1)


def init_params(key):
    """PyTorch nn.Linear-style init; weights (out,in), biases (out,1)."""
    k1, k2, k3, k4, k5, k6 = jax.random.split(key, 6)

    def linear(kw, kb, fan_in, fan_out):
        bound = 1.0 / jnp.sqrt(fan_in)
        w = jax.random.uniform(kw, (fan_out, fan_in), jnp.float32, -bound, bound)
        b = jax.random.uniform(kb, (fan_out, 1), jnp.float32, -bound, bound)
        return w, b

    w1, b1 = linear(k1, k2, 11, 64)
    w2, b2 = linear(k3, k4, 64, 32)
    w3, b3 = linear(k5, k6, 32, 1)
    return (w1, b1, w2, b2, w3, b3)


def reference_forward(x, params):
    w1, b1, w2, b2, w3, b3 = params
    h1 = _leaky_relu(x @ w1.T + b1[:, 0])
    h2 = _leaky_relu(h1 @ w2.T + b2[:, 0])
    return jax.nn.sigmoid(h2 @ w3.T + b3[:, 0])


if __name__ == "__main__":
    key = jax.random.PRNGKey(0)
    kx, kp = jax.random.split(key)

    B = 8
    x = jax.random.normal(kx, (B, 11), dtype=jnp.float32)
    params = init_params(kp)

    # f32 MXU path
    out = jax.block_until_ready(pred_model_forward(x, params))
    ref = reference_forward(x, params)
    assert out.shape == (B, 1)
    assert jnp.allclose(out, ref, atol=2e-3, rtol=2e-3), float(jnp.max(jnp.abs(out - ref)))

    # bf16 MXU operands (v6e/v7x-friendly), f32 accumulate / activations
    out_bf16 = jax.block_until_ready(
        pred_model_forward(x, params, matmul_dtype=jnp.bfloat16))
    assert jnp.allclose(out_bf16, ref, atol=3e-2, rtol=3e-2)

    # Larger, non-tile-aligned batch to exercise the grid + padding path
    B2 = 1000
    x2 = jax.random.normal(jax.random.PRNGKey(1), (B2, 11), dtype=jnp.float32)
    out2 = jax.block_until_ready(pred_model_forward(x2, params, block_b=256))
    ref2 = reference_forward(x2, params)
    assert out2.shape == (B2, 1)
    assert jnp.allclose(out2, ref2, atol=2e-3, rtol=2e-3)

    print("KERNEL_OK")
</pallas_src>

<mosaic_0001>
module attributes {stable_mosaic.version = 11 : i64} {
  func.func @mlp_kernel(%arg0: i32, %arg1: memref<11x128xf32, #tpu.memory_space<vmem>>, %arg2: memref<64x11xf32, #tpu.memory_space<vmem>>, %arg3: memref<64x1xf32, #tpu.memory_space<vmem>>, %arg4: memref<32x64xf32, #tpu.memory_space<vmem>>, %arg5: memref<32x1xf32, #tpu.memory_space<vmem>>, %arg6: memref<1x32xf32, #tpu.memory_space<vmem>>, %arg7: memref<1x1xf32, #tpu.memory_space<vmem>>, %arg8: memref<1x128xf32, #tpu.memory_space<vmem>>) attributes {dimension_semantics = [#tpu.dimension_semantics<parallel>], iteration_bounds = array<i64: 1>, scalar_prefetch = 0 : i64, scratch_operands = 0 : i64, tpu.core_type = #tpu.core_type<tc>, window_params = [{transform_indices = @transform_0, window_bounds = array<i64: 11, 128>}, {pipeline_mode = #tpu.pipeline_mode<synchronous>, transform_indices = @transform_1, window_bounds = array<i64: 64, 11>}, {pipeline_mode = #tpu.pipeline_mode<synchronous>, transform_indices = @transform_2, window_bounds = array<i64: 64, 1>}, {pipeline_mode = #tpu.pipeline_mode<synchronous>, transform_indices = @transform_3, window_bounds = array<i64: 32, 64>}, {pipeline_mode = #tpu.pipeline_mode<synchronous>, transform_indices = @transform_4, window_bounds = array<i64: 32, 1>}, {pipeline_mode = #tpu.pipeline_mode<synchronous>, transform_indices = @transform_5, window_bounds = array<i64: 1, 32>}, {pipeline_mode = #tpu.pipeline_mode<synchronous>, transform_indices = @transform_6, window_bounds = array<i64: 1, 1>}, {transform_indices = @transform_7, window_bounds = array<i64: 1, 128>}]} {
    %c0 = arith.constant 0 : index
    %c0_0 = arith.constant 0 : index
    %0 = vector.load %arg1[%c0, %c0_0] : memref<11x128xf32, #tpu.memory_space<vmem>>, vector<11x128xf32>
    %c0_1 = arith.constant 0 : index
    %c0_2 = arith.constant 0 : index
    %1 = vector.load %arg2[%c0_1, %c0_2] : memref<64x11xf32, #tpu.memory_space<vmem>>, vector<64x11xf32>
    %cst = arith.constant dense<0.000000e+00> : vector<64x128xf32>
    %2 = tpu.matmul %1, %0, %cst {dimension_numbers = #tpu.dot_dimension_numbers<[1], [0], [0], [1], [0, 0, 1, 1], [], []>} : vector<64x11xf32>, vector<11x128xf32>, vector<64x128xf32> -> vector<64x128xf32>
    %c0_3 = arith.constant 0 : index
    %c0_4 = arith.constant 0 : index
    %3 = vector.load %arg3[%c0_3, %c0_4] : memref<64x1xf32, #tpu.memory_space<vmem>>, vector<64x1xf32>
    %4 = vector.broadcast %3 : vector<64x1xf32> to vector<64x128xf32>
    %5 = arith.addf %2, %4 : vector<64x128xf32>
    %cst_5 = arith.constant 0.000000e+00 : f32
    %6 = vector.broadcast %cst_5 : f32 to vector<64x128xf32>
    %7 = arith.cmpf ogt, %5, %6 : vector<64x128xf32>
    %cst_6 = arith.constant 0.00999999977 : f32
    %8 = vector.broadcast %cst_6 : f32 to vector<64x128xf32>
    %9 = arith.mulf %8, %5 : vector<64x128xf32>
    %10 = arith.select %7, %5, %9 : vector<64x128xi1>, vector<64x128xf32>
    %c0_7 = arith.constant 0 : index
    %c0_8 = arith.constant 0 : index
    %11 = vector.load %arg4[%c0_7, %c0_8] : memref<32x64xf32, #tpu.memory_space<vmem>>, vector<32x64xf32>
    %cst_9 = arith.constant dense<0.000000e+00> : vector<32x128xf32>
    %12 = tpu.matmul %11, %10, %cst_9 {dimension_numbers = #tpu.dot_dimension_numbers<[1], [0], [0], [1], [0, 0, 1, 1], [], []>} : vector<32x64xf32>, vector<64x128xf32>, vector<32x128xf32> -> vector<32x128xf32>
    %c0_10 = arith.constant 0 : index
    %c0_11 = arith.constant 0 : index
    %13 = vector.load %arg5[%c0_10, %c0_11] : memref<32x1xf32, #tpu.memory_space<vmem>>, vector<32x1xf32>
    %14 = vector.broadcast %13 : vector<32x1xf32> to vector<32x128xf32>
    %15 = arith.addf %12, %14 : vector<32x128xf32>
    %cst_12 = arith.constant 0.000000e+00 : f32
    %16 = vector.broadcast %cst_12 : f32 to vector<32x128xf32>
    %17 = arith.cmpf ogt, %15, %16 : vector<32x128xf32>
    %cst_13 = arith.constant 0.00999999977 : f32
    %18 = vector.broadcast %cst_13 : f32 to vector<32x128xf32>
    %19 = arith.mulf %18, %15 : vector<32x128xf32>
    %20 = arith.select %17, %15, %19 : vector<32x128xi1>, vector<32x128xf32>
    %c0_14 = arith.constant 0 : index
    %c0_15 = arith.constant 0 : index
    %21 = vector.load %arg6[%c0_14, %c0_15] : memref<1x32xf32, #tpu.memory_space<vmem>>, vector<1x32xf32>
    %cst_16 = arith.constant dense<0.000000e+00> : vector<1x128xf32>
    %22 = tpu.matmul %21, %20, %cst_16 {dimension_numbers = #tpu.dot_dimension_numbers<[1], [0], [0], [1], [0, 0, 1, 1], [], []>} : vector<1x32xf32>, vector<32x128xf32>, vector<1x128xf32> -> vector<1x128xf32>
    %c0_17 = arith.constant 0 : index
    %c0_18 = arith.constant 0 : index
    %23 = vector.load %arg7[%c0_17, %c0_18] : memref<1x1xf32, #tpu.memory_space<vmem>>, vector<1x1xf32>
    %24 = vector.broadcast %23 : vector<1x1xf32> to vector<1x128xf32>
    %25 = arith.addf %22, %24 : vector<1x128xf32>
    %cst_19 = arith.constant 0.000000e+00 : f32
    %26 = vector.broadcast %cst_19 : f32 to vector<1x128xf32>
    %27 = arith.subf %26, %25 : vector<1x128xf32>
    %28 = math.exp %27 : vector<1x128xf32>
    %cst_20 = arith.constant 1.000000e+00 : f32
    %29 = vector.broadcast %cst_20 : f32 to vector<1x128xf32>
    %30 = arith.addf %29, %28 : vector<1x128xf32>
    %31 = tpu.reciprocal %30 {approx = true} : vector<1x128xf32> -> vector<1x128xf32>
    %c0_21 = arith.constant 0 : index
    %c0_22 = arith.constant 0 : index
    %32 = vector.load %arg8[%c0_21, %c0_22] : memref<1x128xf32, #tpu.memory_space<vmem>>, vector<1x128xf32>
    tpu.vector_store %arg8[%c0_21, %c0_22], %31 {strides = array<i32>} : memref<1x128xf32, #tpu.memory_space<vmem>>, vector<1x128xf32>,
    return
  }
  func.func @transform_0(%arg0: i32) -> (i32, i32) {
    %c0_i32 = arith.constant 0 : i32
    %c0_i32_0 = arith.constant 0 : i32
    return %c0_i32, %arg0 : i32, i32
  }
  func.func @transform_1(%arg0: i32) -> (i32, i32) {
    %c0_i32 = arith.constant 0 : i32
    %c0_i32_0 = arith.constant 0 : i32
    %c0_i32_1 = arith.constant 0 : i32
    return %c0_i32, %c0_i32_0 : i32, i32
  }
  func.func @transform_2(%arg0: i32) -> (i32, i32) {
    %c0_i32 = arith.constant 0 : i32
    %c0_i32_0 = arith.constant 0 : i32
    %c0_i32_1 = arith.constant 0 : i32
    return %c0_i32, %c0_i32_0 : i32, i32
  }
  func.func @transform_3(%arg0: i32) -> (i32, i32) {
    %c0_i32 = arith.constant 0 : i32
    %c0_i32_0 = arith.constant 0 : i32
    %c0_i32_1 = arith.constant 0 : i32
    return %c0_i32, %c0_i32_0 : i32, i32
  }
  func.func @transform_4(%arg0: i32) -> (i32, i32) {
    %c0_i32 = arith.constant 0 : i32
    %c0_i32_0 = arith.constant 0 : i32
    %c0_i32_1 = arith.constant 0 : i32
    return %c0_i32, %c0_i32_0 : i32, i32
  }
  func.func @transform_5(%arg0: i32) -> (i32, i32) {
    %c0_i32 = arith.constant 0 : i32
    %c0_i32_0 = arith.constant 0 : i32
    %c0_i32_1 = arith.constant 0 : i32
    return %c0_i32, %c0_i32_0 : i32, i32
  }
  func.func @transform_6(%arg0: i32) -> (i32, i32) {
    %c0_i32 = arith.constant 0 : i32
    %c0_i32_0 = arith.constant 0 : i32
    %c0_i32_1 = arith.constant 0 : i32
    return %c0_i32, %c0_i32_0 : i32, i32
  }
  func.func @transform_7(%arg0: i32) -> (i32, i32) {
    %c0_i32 = arith.constant 0 : i32
    %c0_i32_0 = arith.constant 0 : i32
    return %c0_i32, %arg0 : i32, i32
  }
}

</mosaic_0001>

<llo_original>
// kernel: tpu_custom_call.1
$region0: #{tpu_custom_call.1}
  #allocation0 [shape = 'u32[]', space=smem, size = 0x4, offset = 0x4, fixed_abs, tag = 'smem constant byte address 0x4 - core index']
  #allocation1 [shape = 'u32[144,128]{1,0:T(1,128)}', space=vmem, size = 0x12000, scoped, tag = 'internal scratch']
  #allocation2 [shape = 'f32[1,1]{1,0:T(1,128)S(1)}', space=vmem, size = 0x200, scoped, tag = 'scoped memory for tpu_custom_call.1']
  %s0 = inlined_call_operand.vmem [shape: f32[11,128], index: 0, kind: input, shape index: {}]
  %s1 = inlined_call_operand.vmem [shape: f32[64,11], index: 1, kind: input, shape index: {}]
  %s2 = inlined_call_operand.vmem [shape: f32[64,1], index: 2, kind: input, shape index: {}]
  %s3 = inlined_call_operand.vmem [shape: f32[32,64], index: 3, kind: input, shape index: {}]
  %s4 = inlined_call_operand.vmem [shape: f32[32,1], index: 4, kind: input, shape index: {}]
  %s5 = inlined_call_operand.vmem [shape: f32[1,32], index: 5, kind: input, shape index: {}]
  %s6 = inlined_call_operand.<no memory space> [shape: f32[1,1], index: 6, kind: input, shape index: {}]
  %s7 = inlined_call_operand.hbm [shape: f32[1,128], index: 7, kind: output, shape index: {}]
  %s8 = sld [smem:[#allocation0]]
  $region38: #{tpu_custom_call.1} parent=0
    _
  %s10 = ssub.s32 1, %s8
  %s11 = scalar_select 0, %s10, %s8
  %v12 = vstv %s6
  %13 = vst [vmem:[#allocation2] sm:$0x1] %v12
  $region1: #{tpu_custom_call.1} parent=0
    #allocation3 [shape = 'u8[512]{0}', space=vmem, size = 0x400, scoped, tag = 'output window, operand 0, single buffered']
    #allocation4 [shape = 's32[1]{0}', space=sflag, size = 0x4, scoped, tag = 'scoped memory for tpu_custom_call.1']
    %14 = vsyncpa [#allocation4], 0
    // Predicated region
    $region2: #{tpu_custom_call.1} parent=1 // pred_check
      _
    $region3: #{tpu_custom_call.1} parent=1 // pred_check_branch
      %16 = sbr.rel (0) target = $region5
    $region4: #{tpu_custom_call.1} parent=1 // pred_region
      _
    $region5: #{tpu_custom_call.1} parent=1 // pred_fallthru
      _
    // Predicated region
    $region6: #{tpu_custom_call.1} parent=1 // pred_check
      _
    $region7: #{tpu_custom_call.1} parent=1 // pred_check_branch
      %18 = sbr.rel (0) target = $region9
    $region8: #{tpu_custom_call.1} parent=1 // pred_region
      _
    $region9: #{tpu_custom_call.1} parent=1 // pred_fallthru
      _
    // Predicated region
    $region10: #{tpu_custom_call.1} parent=1 // pred_check
      _
    $region11: #{tpu_custom_call.1} parent=1 // pred_check_branch
      %20 = sbr.rel (0) target = $region13
    $region12: #{tpu_custom_call.1} parent=1 // pred_region
      _
    $region13: #{tpu_custom_call.1} parent=1 // pred_fallthru
      _
    // Predicated region
    $region14: #{tpu_custom_call.1} parent=1 // pred_check
      _
    $region15: #{tpu_custom_call.1} parent=1 // pred_check_branch
      %22 = sbr.rel (0) target = $region17
    $region16: #{tpu_custom_call.1} parent=1 // pred_region
      _
    $region17: #{tpu_custom_call.1} parent=1 // pred_fallthru
      _
    // Predicated region
    $region18: #{tpu_custom_call.1} parent=1 // pred_check
      _
    $region19: #{tpu_custom_call.1} parent=1 // pred_check_branch
      %24 = sbr.rel (0) target = $region21
    $region20: #{tpu_custom_call.1} parent=1 // pred_region
      _
    $region21: #{tpu_custom_call.1} parent=1 // pred_fallthru
      _
    // Predicated region
    $region22: #{tpu_custom_call.1} parent=1 // pred_check
      _
    $region23: #{tpu_custom_call.1} parent=1 // pred_check_branch
      %26 = sbr.rel (0) target = $region25
    $region24: #{tpu_custom_call.1} parent=1 // pred_region
      _
    $region25: #{tpu_custom_call.1} parent=1 // pred_fallthru
      _
    // Predicated region
    $region26: #{tpu_custom_call.1} parent=1 // pred_check
      _
    $region27: #{tpu_custom_call.1} parent=1 // pred_check_branch
      %28 = sbr.rel (0) target = $region29
    $region28: #{tpu_custom_call.1} parent=1 // pred_region
      _
    $region29: #{tpu_custom_call.1} parent=1 // pred_fallthru
      _
    %v29 = vld [vmem:[%s0] sm:$0xff]
    %v30 = vld [vmem:[%s0 + $0x8] sm:$0x7]
    %v31 = vld [vmem:[%s1] sm:$0xff]
    %v32 = vld [vmem:[%s1 + $0x8] sm:$0xff]
    %v33 = vld [vmem:[%s1 + $0x10] sm:$0xff]
    %v34 = vld [vmem:[%s1 + $0x18] sm:$0xff]
    %v35 = vld [vmem:[%s1 + $0x20] sm:$0xff]
    %v36 = vld [vmem:[%s1 + $0x28] sm:$0xff]
    %v37 = vld [vmem:[%s1 + $0x30] sm:$0xff]
    %v38 = vld [vmem:[%s1 + $0x38] sm:$0xff]
    %v39 = vld [vmem:[%s2] sm:$0xff]
    %v40 = vld [vmem:[%s2 + $0x8] sm:$0xff]
    %v41 = vld [vmem:[%s2 + $0x10] sm:$0xff]
    %v42 = vld [vmem:[%s2 + $0x18] sm:$0xff]
    %v43 = vld [vmem:[%s2 + $0x20] sm:$0xff]
    %v44 = vld [vmem:[%s2 + $0x28] sm:$0xff]
    %v45 = vld [vmem:[%s2 + $0x30] sm:$0xff]
    %v46 = vld [vmem:[%s2 + $0x38] sm:$0xff]
    %48 = vset.pattern.permute.xlu0 0
    %49 = vperm.xlu0 %48, %v39
    %v50 = vpop.permute.xlu0 %49
    %53 = vset.pattern.permute.xlu0 0
    %54 = vperm.xlu0 %53, %v40
    %v55 = vpop.permute.xlu0 %54
    %58 = vset.pattern.permute.xlu0 0
    %59 = vperm.xlu0 %58, %v41
    %v60 = vpop.permute.xlu0 %59
    %63 = vset.pattern.permute.xlu0 0
    %64 = vperm.xlu0 %63, %v42
    %v65 = vpop.permute.xlu0 %64
    %68 = vset.pattern.permute.xlu0 0
    %69 = vperm.xlu0 %68, %v43
    %v70 = vpop.permute.xlu0 %69
    %73 = vset.pattern.permute.xlu0 0
    %74 = vperm.xlu0 %73, %v44
    %v75 = vpop.permute.xlu0 %74
    %78 = vset.pattern.permute.xlu0 0
    %79 = vperm.xlu0 %78, %v45
    %v80 = vpop.permute.xlu0 %79
    %83 = vset.pattern.permute.xlu0 0
    %84 = vperm.xlu0 %83, %v46
    %v85 = vpop.permute.xlu0 %84
    %vm87 = vcmask 89088
    %v89 = vsel %vm87, %v31, 0
    %v92 = vsel %vm87, %v32, 0
    %v95 = vsel %vm87, %v33, 0
    %v98 = vsel %vm87, %v34, 0
    %v101 = vsel %vm87, %v35, 0
    %v104 = vsel %vm87, %v36, 0
    %v107 = vsel %vm87, %v37, 0
    %v110 = vsel %vm87, %v38, 0
    %vm112 = vcmask 1042432
    %v114 = vsel %vm112, %v30, 0
    %116 = vmatprep.subr.mxu0 0.0
    %117 = vmatpush1.msra.mxu0 %v29
    %118 = vmatprep.subr.mxu0 0.0
    %119 = vmatpush1.msra.mxu0 %v114
    %120 = vmatprep.subr.mxu0 0.0
    %121 = vmatpush1.msra.mxu0 0.0
    %122 = vmatprep.subr.mxu0 0.0
    %123 = vmatpush1.msra.mxu0 0.0
    %124 = vmatprep.subr.mxu0 0.0
    %125 = vmatpush1.msra.mxu0 0.0
    %126 = vmatprep.subr.mxu0 0.0
    %127 = vmatpush1.msra.mxu0 0.0
    %128 = vmatprep.subr.mxu0 0.0
    %129 = vmatpush1.msra.mxu0 0.0
    %130 = vmatprep.subr.mxu0 0.0
    %131 = vmatpush1.msra.mxu0 0.0
    %132 = vmatprep.subr.mxu0 0.0
    %133 = vmatpush1.msra.mxu0 0.0
    %134 = vmatprep.subr.mxu0 0.0
    %135 = vmatpush1.msra.mxu0 0.0
    %136 = vmatprep.subr.mxu0 0.0
    %137 = vmatpush1.msra.mxu0 0.0
    %138 = vmatprep.subr.mxu0 0.0
    %139 = vmatpush1.msra.mxu0 0.0
    %140 = vmatprep.subr.mxu0 0.0
    %141 = vmatpush1.msra.mxu0 0.0
    %142 = vmatprep.subr.mxu0 0.0
    %143 = vmatpush1.msra.mxu0 0.0
    %144 = vmatprep.subr.mxu0 0.0
    %145 = vmatpush1.msra.mxu0 0.0
    %146 = vmatprep.subr.mxu0 0.0
    %147 = vmatpush1.msra.mxu0 0.0
    %148 = vmatprep.subr.mxu0 0.0
    %149 = vmatpush1.msra.mxu0 0.0
    %150 = vmatprep.subr.mxu0 0.0
    %151 = vmatpush1.msra.mxu0 0.0
    %152 = vmatprep.subr.mxu0 0.0
    %153 = vmatpush1.msra.mxu0 0.0
    %154 = vmatprep.subr.mxu0 0.0
    %155 = vmatpush1.msra.mxu0 0.0
    %156 = vmatprep.subr.mxu0 0.0
    %157 = vmatpush1.msra.mxu0 0.0
    %158 = vmatprep.subr.mxu0 0.0
    %159 = vmatpush1.msra.mxu0 0.0
    %160 = vmatprep.subr.mxu0 0.0
    %161 = vmatpush1.msra.mxu0 0.0
    %162 = vmatprep.subr.mxu0 0.0
    %163 = vmatpush1.msra.mxu0 0.0
    %164 = vmatprep.subr.mxu0 0.0
    %165 = vmatpush1.msra.mxu0 0.0
    %166 = vmatprep.subr.mxu0 0.0
    %167 = vmatpush1.msra.mxu0 0.0
    %168 = vmatprep.subr.mxu0 0.0
    %169 = vmatpush1.msra.mxu0 0.0
    %170 = vmatprep.subr.mxu0 0.0
    %171 = vmatpush1.msra.mxu0 0.0
    %172 = vmatprep.subr.mxu0 0.0
    %173 = vmatpush1.msra.mxu0 0.0
    %174 = vmatprep.subr.mxu0 0.0
    %175 = vmatpush1.msra.mxu0 0.0
    %176 = vmatprep.subr.mxu0 0.0
    %177 = vmatpush1.msra.mxu0 0.0
    %178 = vmatprep.subr.mxu0 0.0
    %179 = vmatpush1.msra.mxu0 0.0
    %180 = vmatprep.mubr.f32.mxu0 0.0
    %181 = vmatmul.mubr.f32.gmra.mrb[0].mxu0 %v89
    %v182 = vpop.f32.mrb[0].mxu0
    %v183 = vadd.f32 %v50, %v182
    %v184 = vpop.f32.mrb[0].mxu0
    %185 = vmatprep.mubr.f32.mxu0 0.0
    %186 = vmatmul.mubr.f32.gmra.mrb[0].mxu0 %v92
    %v187 = vpop.f32.mrb[0].mxu0
    %v188 = vadd.f32 %v55, %v187
    %v189 = vpop.f32.mrb[0].mxu0
    %190 = vmatprep.mubr.f32.mxu0 0.0
    %191 = vmatmul.mubr.f32.gmra.mrb[0].mxu0 %v95
    %v192 = vpop.f32.mrb[0].mxu0
    %v193 = vadd.f32 %v60, %v192
    %v194 = vpop.f32.mrb[0].mxu0
    %195 = vmatprep.mubr.f32.mxu0 0.0
    %196 = vmatmul.mubr.f32.gmra.mrb[0].mxu0 %v98
    %v197 = vpop.f32.mrb[0].mxu0
    %v198 = vadd.f32 %v65, %v197
    %v199 = vpop.f32.mrb[0].mxu0
    %200 = vmatprep.mubr.f32.mxu0 0.0
    %201 = vmatmul.mubr.f32.gmra.mrb[0].mxu0 %v101
    %v202 = vpop.f32.mrb[0].mxu0
    %v203 = vadd.f32 %v70, %v202
    %v204 = vpop.f32.mrb[0].mxu0
    %205 = vmatprep.mubr.f32.mxu0 0.0
    %206 = vmatmul.mubr.f32.gmra.mrb[0].mxu0 %v104
    %v207 = vpop.f32.mrb[0].mxu0
    %v208 = vadd.f32 %v75, %v207
    %v209 = vpop.f32.mrb[0].mxu0
    %210 = vmatprep.mubr.f32.mxu0 0.0
    %211 = vmatmul.mubr.f32.gmra.mrb[0].mxu0 %v107
    %v212 = vpop.f32.mrb[0].mxu0
    %v213 = vadd.f32 %v80, %v212
    %v214 = vpop.f32.mrb[0].mxu0
    %215 = vmatprep.mubr.f32.mxu0 0.0
    %216 = vmatmul.mubr.f32.gmra.mrb[0].mxu0 %v110
    %v217 = vpop.f32.mrb[0].mxu0
    %v218 = vadd.f32 %v85, %v217
    %v219 = vpop.f32.mrb[0].mxu0
    %220 = vdwg.mxu0
    %vm221 = vcmp.gt.f32.partialorder %v183, 0.0
    %vm222 = vcmp.gt.f32.partialorder %v188, 0.0
    %vm223 = vcmp.gt.f32.partialorder %v193, 0.0
    %vm224 = vcmp.gt.f32.partialorder %v198, 0.0
    %vm225 = vcmp.gt.f32.partialorder %v203, 0.0
    %vm226 = vcmp.gt.f32.partialorder %v208, 0.0
    %vm227 = vcmp.gt.f32.partialorder %v213, 0.0
    %vm228 = vcmp.gt.f32.partialorder %v218, 0.0
    %v229 = vmul.f32 %v183, 0.01
    %v230 = vmul.f32 %v188, 0.01
    %v231 = vmul.f32 %v193, 0.01
    %v232 = vmul.f32 %v198, 0.01
    %v233 = vmul.f32 %v203, 0.01
    %v234 = vmul.f32 %v208, 0.01
    %v235 = vmul.f32 %v213, 0.01
    %v236 = vmul.f32 %v218, 0.01
    %v237 = vsel %vm221, %v183, %v229
    %v238 = vsel %vm222, %v188, %v230
    %v239 = vsel %vm223, %v193, %v231
    %v240 = vsel %vm224, %v198, %v232
    %v241 = vsel %vm225, %v203, %v233
    %v242 = vsel %vm226, %v208, %v234
    %v243 = vsel %vm227, %v213, %v235
    %v244 = vsel %vm228, %v218, %v236
    %v245 = vld [vmem:[%s3] sm:$0xff]
    %v246 = vld [vmem:[%s3 + $0x8] sm:$0xff]
    %v247 = vld [vmem:[%s3 + $0x10] sm:$0xff]
    %v248 = vld [vmem:[%s3 + $0x18] sm:$0xff]
    %v249 = vld [vmem:[%s4] sm:$0xff]
    %v250 = vld [vmem:[%s4 + $0x8] sm:$0xff]
    %v251 = vld [vmem:[%s4 + $0x10] sm:$0xff]
    %v252 = vld [vmem:[%s4 + $0x18] sm:$0xff]
    %254 = vset.pattern.permute.xlu0 0
    %255 = vperm.xlu0 %254, %v249
    %v256 = vpop.permute.xlu0 %255
    %259 = vset.pattern.permute.xlu0 0
    %260 = vperm.xlu0 %259, %v250
    %v261 = vpop.permute.xlu0 %260
    %264 = vset.pattern.permute.xlu0 0
    %265 = vperm.xlu0 %264, %v251
    %v266 = vpop.permute.xlu0 %265
    %269 = vset.pattern.permute.xlu0 0
    %270 = vperm.xlu0 %269, %v252
    %v271 = vpop.permute.xlu0 %270
    %vm273 = vcmask 523264
    %v275 = vsel %vm273, %v245, 0
    %v278 = vsel %vm273, %v246, 0
    %v281 = vsel %vm273, %v247, 0
    %v284 = vsel %vm273, %v248, 0
    %286 = vmatprep.subr.mxu0 0.0
    %287 = vmatpush1.msra.mxu0 %v237
    %288 = vmatprep.subr.mxu0 0.0
    %289 = vmatpush1.msra.mxu0 %v238
    %290 = vmatprep.subr.mxu0 0.0
    %291 = vmatpush1.msra.mxu0 %v239
    %292 = vmatprep.subr.mxu0 0.0
    %293 = vmatpush1.msra.mxu0 %v240
    %294 = vmatprep.subr.mxu0 0.0
    %295 = vmatpush1.msra.mxu0 %v241
    %296 = vmatprep.subr.mxu0 0.0
    %297 = vmatpush1.msra.mxu0 %v242
    %298 = vmatprep.subr.mxu0 0.0
    %299 = vmatpush1.msra.mxu0 %v243
    %300 = vmatprep.subr.mxu0 0.0
    %301 = vmatpush1.msra.mxu0 %v244
    %302 = vmatprep.subr.mxu0 0.0
    %303 = vmatpush1.msra.mxu0 0.0
    %304 = vmatprep.subr.mxu0 0.0
    %305 = vmatpush1.msra.mxu0 0.0
    %306 = vmatprep.subr.mxu0 0.0
    %307 = vmatpush1.msra.mxu0 0.0
    %308 = vmatprep.subr.mxu0 0.0
    %309 = vmatpush1.msra.mxu0 0.0
    %310 = vmatprep.subr.mxu0 0.0
    %311 = vmatpush1.msra.mxu0 0.0
    %312 = vmatprep.subr.mxu0 0.0
    %313 = vmatpush1.msra.mxu0 0.0
    %314 = vmatprep.subr.mxu0 0.0
    %315 = vmatpush1.msra.mxu0 0.0
    %316 = vmatprep.subr.mxu0 0.0
    %317 = vmatpush1.msra.mxu0 0.0
    %318 = vmatprep.subr.mxu0 0.0
    %319 = vmatpush1.msra.mxu0 0.0
    %320 = vmatprep.subr.mxu0 0.0
    %321 = vmatpush1.msra.mxu0 0.0
    %322 = vmatprep.subr.mxu0 0.0
    %323 = vmatpush1.msra.mxu0 0.0
    %324 = vmatprep.subr.mxu0 0.0
    %325 = vmatpush1.msra.mxu0 0.0
    %326 = vmatprep.subr.mxu0 0.0
    %327 = vmatpush1.msra.mxu0 0.0
    %328 = vmatprep.subr.mxu0 0.0
    %329 = vmatpush1.msra.mxu0 0.0
    %330 = vmatprep.subr.mxu0 0.0
    %331 = vmatpush1.msra.mxu0 0.0
    %332 = vmatprep.subr.mxu0 0.0
    %333 = vmatpush1.msra.mxu0 0.0
    %334 = vmatprep.subr.mxu0 0.0
    %335 = vmatpush1.msra.mxu0 0.0
    %336 = vmatprep.subr.mxu0 0.0
    %337 = vmatpush1.msra.mxu0 0.0
    %338 = vmatprep.subr.mxu0 0.0
    %339 = vmatpush1.msra.mxu0 0.0
    %340 = vmatprep.subr.mxu0 0.0
    %341 = vmatpush1.msra.mxu0 0.0
    %342 = vmatprep.subr.mxu0 0.0
    %343 = vmatpush1.msra.mxu0 0.0
    %344 = vmatprep.subr.mxu0 0.0
    %345 = vmatpush1.msra.mxu0 0.0
    %346 = vmatprep.subr.mxu0 0.0
    %347 = vmatpush1.msra.mxu0 0.0
    %348 = vmatprep.subr.mxu0 0.0
    %349 = vmatpush1.msra.mxu0 0.0
    %350 = vmatprep.mubr.f32.mxu0 0.0
    %351 = vmatmul.mubr.f32.gmra.mrb[0].mxu0 %v275
    %v352 = vpop.f32.mrb[0].mxu0
    %v353 = vadd.f32 %v256, %v352
    %v354 = vpop.f32.mrb[0].mxu0
    %355 = vmatprep.mubr.f32.mxu0 0.0
    %356 = vmatmul.mubr.f32.gmra.mrb[0].mxu0 %v278
    %v357 = vpop.f32.mrb[0].mxu0
    %v358 = vadd.f32 %v261, %v357
    %v359 = vpop.f32.mrb[0].mxu0
    %360 = vmatprep.mubr.f32.mxu0 0.0
    %361 = vmatmul.mubr.f32.gmra.mrb[0].mxu0 %v281
    %v362 = vpop.f32.mrb[0].mxu0
    %v363 = vadd.f32 %v266, %v362
    %v364 = vpop.f32.mrb[0].mxu0
    %365 = vmatprep.mubr.f32.mxu0 0.0
    %366 = vmatmul.mubr.f32.gmra.mrb[0].mxu0 %v284
    %v367 = vpop.f32.mrb[0].mxu0
    %v368 = vadd.f32 %v271, %v367
    %v369 = vpop.f32.mrb[0].mxu0
    %370 = vdwg.mxu0
    %vm371 = vcmp.gt.f32.partialorder %v353, 0.0
    %vm372 = vcmp.gt.f32.partialorder %v358, 0.0
    %vm373 = vcmp.gt.f32.partialorder %v363, 0.0
    %vm374 = vcmp.gt.f32.partialorder %v368, 0.0
    %v375 = vmul.f32 %v353, 0.01
    %v376 = vmul.f32 %v358, 0.01
    %v377 = vmul.f32 %v363, 0.01
    %v378 = vmul.f32 %v368, 0.01
    %v379 = vsel %vm371, %v353, %v375
    %v380 = vsel %vm372, %v358, %v376
    %v381 = vsel %vm373, %v363, %v377
    %v382 = vsel %vm374, %v368, %v378
    %v383 = vld [vmem:[%s5] sm:$0x1]
    %v384 = vld [vmem:[#allocation2] sm:$0x1]
    %386 = vset.pattern.permute.xlu0 0
    %387 = vperm.xlu0 %386, %v384
    %v388 = vpop.permute.xlu0 %387
    %v390 = vlaneseq
    %v391 = vshrl.u32 %v390, 7
    %v392 = vsub.s32 0, %v391
    %v393 = vrot.slane %v388, %v392
    %vm394 = vcmask 261120
    %v396 = vsel %vm394, %v383, 0
    %398 = vmatprep.subr.mxu0 0.0
    %399 = vmatpush1.msra.mxu0 %v379
    %400 = vmatprep.subr.mxu0 0.0
    %401 = vmatpush1.msra.mxu0 %v380
    %402 = vmatprep.subr.mxu0 0.0
    %403 = vmatpush1.msra.mxu0 %v381
    %404 = vmatprep.subr.mxu0 0.0
    %405 = vmatpush1.msra.mxu0 %v382
    %406 = vmatprep.subr.mxu0 0.0
    %407 = vmatpush1.msra.mxu0 0.0
    %408 = vmatprep.subr.mxu0 0.0
    %409 = vmatpush1.msra.mxu0 0.0
    %410 = vmatprep.subr.mxu0 0.0
    %411 = vmatpush1.msra.mxu0 0.0
    %412 = vmatprep.subr.mxu0 0.0
    %413 = vmatpush1.msra.mxu0 0.0
    %414 = vmatprep.subr.mxu0 0.0
    %415 = vmatpush1.msra.mxu0 0.0
    %416 = vmatprep.subr.mxu0 0.0
    %417 = vmatpush1.msra.mxu0 0.0
    %418 = vmatprep.subr.mxu0 0.0
    %419 = vmatpush1.msra.mxu0 0.0
    %420 = vmatprep.subr.mxu0 0.0
    %421 = vmatpush1.msra.mxu0 0.0
    %422 = vmatprep.subr.mxu0 0.0
    %423 = vmatpush1.msra.mxu0 0.0
    %424 = vmatprep.subr.mxu0 0.0
    %425 = vmatpush1.msra.mxu0 0.0
    %426 = vmatprep.subr.mxu0 0.0
    %427 = vmatpush1.msra.mxu0 0.0
    %428 = vmatprep.subr.mxu0 0.0
    %429 = vmatpush1.msra.mxu0 0.0
    %430 = vmatprep.subr.mxu0 0.0
    %431 = vmatpush1.msra.mxu0 0.0
    %432 = vmatprep.subr.mxu0 0.0
    %433 = vmatpush1.msra.mxu0 0.0
    %434 = vmatprep.subr.mxu0 0.0
    %435 = vmatpush1.msra.mxu0 0.0
    %436 = vmatprep.subr.mxu0 0.0
    %437 = vmatpush1.msra.mxu0 0.0
    %438 = vmatprep.subr.mxu0 0.0
    %439 = vmatpush1.msra.mxu0 0.0
    %440 = vmatprep.subr.mxu0 0.0
    %441 = vmatpush1.msra.mxu0 0.0
    %442 = vmatprep.subr.mxu0 0.0
    %443 = vmatpush1.msra.mxu0 0.0
    %444 = vmatprep.subr.mxu0 0.0
    %445 = vmatpush1.msra.mxu0 0.0
    %446 = vmatprep.subr.mxu0 0.0
    %447 = vmatpush1.msra.mxu0 0.0
    %448 = vmatprep.subr.mxu0 0.0
    %449 = vmatpush1.msra.mxu0 0.0
    %450 = vmatprep.subr.mxu0 0.0
    %451 = vmatpush1.msra.mxu0 0.0
    %452 = vmatprep.subr.mxu0 0.0
    %453 = vmatpush1.msra.mxu0 0.0
    %454 = vmatprep.subr.mxu0 0.0
    %455 = vmatpush1.msra.mxu0 0.0
    %456 = vmatprep.subr.mxu0 0.0
    %457 = vmatpush1.msra.mxu0 0.0
    %458 = vmatprep.subr.mxu0 0.0
    %459 = vmatpush1.msra.mxu0 0.0
    %460 = vmatprep.subr.mxu0 0.0
    %461 = vmatpush1.msra.mxu0 0.0
    %462 = vmatprep.mubr.f32.mxu0 0.0
    %463 = vmatmul.mubr.f32.gmra.mrb[0].mxu0 %v396
    %v464 = vpop.f32.mrb[0].mxu0
    %v465 = vadd.f32 %v393, %v464
    %v466 = vpop.f32.mrb[0].mxu0
    %467 = vdwg.mxu0
    %v468 = vsub.f32 0.0, %v465
    %v469 = vmul.f32 %v468, 1.442695
    %v470 = vpow.pop %v469
    %v471 = vadd.f32 %v470, 1.0
    %v472 = vrcp.pop %v471
    %473 = vst [vmem:[#allocation3] sm:$0x1] %v472
    // Predicated region
    $region30: #{tpu_custom_call.1} parent=1 // pred_check
      _
    $region31: #{tpu_custom_call.1} parent=1 // pred_check_branch
      %475 = sbr.rel (0) target = $region33
    $region32: #{tpu_custom_call.1} parent=1 // pred_region
      %s477 = ssub.s32 16, 16
      %478 = vsyncadd [#allocation4], %s477
      %s480 = sshll.u32 [#allocation3], 4
      %s481 = int_to_ptr.vmem [resolvable:$true] %s480
      %483 = dma.vmem_to_hbm [thread:$0]  %s481, 16, %s7, [#allocation4]
    $region33: #{tpu_custom_call.1} parent=1 // pred_fallthru
      _
    // Predicated region
    $region34: #{tpu_custom_call.1} parent=1 // pred_check
      _
    $region35: #{tpu_custom_call.1} parent=1 // pred_check_branch
      %485 = sbr.rel (0) target = $region37
    $region36: #{tpu_custom_call.1} parent=1 // pred_region
      %486 = dma.done [#allocation4], 16
    $region37: #{tpu_custom_call.1} parent=1 // pred_fallthru
      _
    %487 = vsyncpa [#allocation4], 1

</llo_original>
